<compile_context>
chip_gen: v7x
topology: tpu7x:2x2x1
jax: 0.10.0
libtpu: 0.0.40
codegen_flags: <defaults>
</compile_context>

<pallas_src>
import jax
import jax.numpy as jnp
from jax.experimental import pallas as pl
from jax.experimental.pallas import tpu as pltpu


def _make_hbm_copy_kernel(chunks):
    """Kernel factory.

    `chunks` is a static tuple of (start, size) Python ints along axis 0 of the
    (already squeezed-shape) array.  The kernel starts one HBM->HBM DMA per
    chunk (all concurrently, each with its own semaphore) and then waits on
    all of them.  No VMEM staging, no grid, no per-step overhead.
    """

    def kernel(x_hbm, o_hbm, sems):
        copies = []
        for idx, (start, size) in enumerate(chunks):
            cp = pltpu.make_async_copy(
                x_hbm.at[pl.ds(start, size)],
                o_hbm.at[pl.ds(start, size)],
                sems.at[idx],
            )
            cp.start()
            copies.append(cp)
        for cp in copies:
            cp.wait()

    return kernel


def _plan_chunks(leading: int, total_bytes: int,
                 *, max_chunks: int = 4, min_bytes: int = 1 << 20):
    """Static (start, size) chunks along the leading axis.

    Small arrays -> a single whole-array DMA.  Large arrays -> up to
    `max_chunks` concurrent DMAs (each >= ~1 MiB) so multiple DMA queues can
    drive HBM in parallel; chunk boundaries are computed in Python, so the
    kernel stays fully static and handles ragged splits for free.
    """
    if leading <= 1 or total_bytes < 2 * min_bytes:
        return ((0, leading),)
    k = int(min(max_chunks, leading, max(1, total_bytes // min_bytes)))
    base, rem = divmod(leading, k)
    chunks, start = [], 0
    for i in range(k):
        size = base + (1 if i < rem else 0)
        chunks.append((start, size))
        start += size
    return tuple(chunks)


def squeeze_pallas(x: jax.Array, dim: int = -1, *, force_kernel: bool = False) -> jax.Array:
    """Equivalent of torch.Tensor.squeeze(dim=dim).

    force_kernel=False : metadata-only reshape (recommended; zero cost).
    force_kernel=True  : route the copy through a Pallas TPU HBM->HBM DMA kernel.
    """
    ndim = x.ndim
    if ndim == 0:
        return x
    d = dim % ndim

    # torch semantics: squeeze(dim) is a no-op when that dim's size != 1.
    if x.shape[d] != 1:
        return x

    out_shape = tuple(s for i, s in enumerate(x.shape) if i != d)

    total = 1
    for s in out_shape:
        total *= s

    # Fast path (production default), plus degenerate outputs (0-d / empty):
    # removing a size-1 axis is a free metadata reshape.
    if not force_kernel or len(out_shape) == 0 or total == 0:
        return x.reshape(out_shape)

    # Dropping a size-1 axis preserves row-major order, so reshaping to the
    # final shape is metadata-only; the kernel is then a pure identity DMA.
    x2 = x.reshape(out_shape)

    itemsize = jnp.dtype(x.dtype).itemsize
    chunks = _plan_chunks(out_shape[0], total * itemsize)

    return pl.pallas_call(
        _make_hbm_copy_kernel(chunks),
        out_shape=jax.ShapeDtypeStruct(out_shape, x.dtype),
        in_specs=[pl.BlockSpec(memory_space=pl.ANY)],
        out_specs=pl.BlockSpec(memory_space=pl.ANY),
        scratch_shapes=[pltpu.SemaphoreType.DMA((len(chunks),))],
        cost_estimate=pl.CostEstimate(
            flops=0,
            transcendentals=0,
            bytes_accessed=2 * total * itemsize,
        ),
    )(x2)


if __name__ == "__main__":
    key = jax.random.PRNGKey(0)

    # Typical EPT-decoder use: scores of shape (batch, seq, hidden, 1)
    # squeezed on the last dim.
    x = jax.random.normal(key, (2, 8, 128, 1), dtype=jnp.float32)
    ref = jnp.squeeze(x, axis=-1)

    # Default fast (metadata-only) path.
    y_fast = jax.block_until_ready(squeeze_pallas(x, dim=-1))
    assert y_fast.shape == ref.shape and y_fast.dtype == ref.dtype
    assert jnp.array_equal(y_fast, ref)

    # Pallas kernel path: single HBM->HBM DMA.
    y_kern = jax.block_until_ready(squeeze_pallas(x, dim=-1, force_kernel=True))
    assert y_kern.shape == ref.shape and y_kern.dtype == ref.dtype
    assert jnp.array_equal(y_kern, ref)

    # bf16: dtype is irrelevant to the DMA path (no layout / sublane tuning).
    xb = jax.random.normal(key, (4, 64, 128, 1), dtype=jnp.bfloat16)
    yb = jax.block_until_ready(squeeze_pallas(xb, dim=-1, force_kernel=True))
    assert jnp.array_equal(yb, jnp.squeeze(xb, axis=-1))

    # Awkward (not 128-divisible) size: whole-array DMA handles it directly --
    # no single-giant-block fallback, no VMEM blow-up risk.
    xc = jax.random.normal(key, (3, 1, 5, 7), dtype=jnp.float32)
    yc = jax.block_until_ready(squeeze_pallas(xc, dim=1, force_kernel=True))
    assert jnp.array_equal(yc, jnp.squeeze(xc, axis=1))

    # Larger tensor (~2 MiB): exercises the multi-chunk concurrent-DMA plan.
    xd = jax.random.normal(key, (512, 1, 1024), dtype=jnp.float32)
    yd = jax.block_until_ready(squeeze_pallas(xd, dim=1, force_kernel=True))
    assert jnp.array_equal(yd, jnp.squeeze(xd, axis=1))

    # torch semantics: no-op when the chosen dim's size != 1.
    x2 = jax.random.normal(key, (2, 8, 128), dtype=jnp.float32)
    y2 = jax.block_until_ready(squeeze_pallas(x2, dim=-1, force_kernel=True))
    assert y2.shape == x2.shape and jnp.array_equal(y2, x2)

    print("KERNEL_OK")
</pallas_src>

<mosaic_0001>
module attributes {stable_mosaic.version = 11 : i64} {
  func.func @kernel(%arg0: memref<2x8x128xf32, #tpu.memory_space<any>>, %arg1: memref<2x8x128xf32, #tpu.memory_space<any>>, %arg2: memref<1x!tpu.dma_semaphore, #tpu.memory_space<semaphore_mem>>) attributes {dimension_semantics = [], scalar_prefetch = 0 : i64, scratch_operands = 1 : i64, tpu.core_type = #tpu.core_type<tc>} {
    %c0_i32 = arith.constant 0 : i32
    %c0_i32_0 = arith.constant 0 : i32
    %c0_i32_1 = arith.constant 0 : i32
    %c0_i32_2 = arith.constant 0 : i32
    %0 = tpu.memref_slice %arg0[%c0_i32_0, %c0_i32_1, %c0_i32_2] : memref<2x8x128xf32, #tpu.memory_space<any>> -> memref<2x8x128xf32, #tpu.memory_space<any>>
    %c0_i32_3 = arith.constant 0 : i32
    %c0_i32_4 = arith.constant 0 : i32
    %c0_i32_5 = arith.constant 0 : i32
    %1 = tpu.memref_slice %arg1[%c0_i32_3, %c0_i32_4, %c0_i32_5] : memref<2x8x128xf32, #tpu.memory_space<any>> -> memref<2x8x128xf32, #tpu.memory_space<any>>
    %2 = tpu.memref_slice %arg2[%c0_i32] : memref<1x!tpu.dma_semaphore, #tpu.memory_space<semaphore_mem>> -> memref<1x!tpu.dma_semaphore, #tpu.memory_space<semaphore_mem>>
    %3 = tpu.memref_squeeze %2 : memref<1x!tpu.dma_semaphore, #tpu.memory_space<semaphore_mem>> -> memref<!tpu.dma_semaphore, #tpu.memory_space<semaphore_mem>>
    tpu.enqueue_dma source(%0 : memref<2x8x128xf32, #tpu.memory_space<any>>) target(%1 : memref<2x8x128xf32, #tpu.memory_space<any>>) target_semaphore(%3 : memref<!tpu.dma_semaphore, #tpu.memory_space<semaphore_mem>>)
    %c0_i32_6 = arith.constant 0 : i32
    %c0_i32_7 = arith.constant 0 : i32
    %c0_i32_8 = arith.constant 0 : i32
    %c0_i32_9 = arith.constant 0 : i32
    %4 = tpu.memref_slice %arg0[%c0_i32_7, %c0_i32_8, %c0_i32_9] : memref<2x8x128xf32, #tpu.memory_space<any>> -> memref<2x8x128xf32, #tpu.memory_space<any>>
    %c0_i32_10 = arith.constant 0 : i32
    %c0_i32_11 = arith.constant 0 : i32
    %c0_i32_12 = arith.constant 0 : i32
    %5 = tpu.memref_slice %arg1[%c0_i32_10, %c0_i32_11, %c0_i32_12] : memref<2x8x128xf32, #tpu.memory_space<any>> -> memref<2x8x128xf32, #tpu.memory_space<any>>
    %6 = tpu.memref_slice %arg2[%c0_i32_6] : memref<1x!tpu.dma_semaphore, #tpu.memory_space<semaphore_mem>> -> memref<1x!tpu.dma_semaphore, #tpu.memory_space<semaphore_mem>>
    %7 = tpu.memref_squeeze %6 : memref<1x!tpu.dma_semaphore, #tpu.memory_space<semaphore_mem>> -> memref<!tpu.dma_semaphore, #tpu.memory_space<semaphore_mem>>
    tpu.wait_dma2 semaphore(%7 : memref<!tpu.dma_semaphore, #tpu.memory_space<semaphore_mem>>) src(%4 : memref<2x8x128xf32, #tpu.memory_space<any>>) dst(%5 : memref<2x8x128xf32, #tpu.memory_space<any>>)
    return
  }
}

</mosaic_0001>

<llo_original>
// kernel: tpu_custom_call.1
$region0: #{tpu_custom_call.1}
  #allocation0 [shape = 'u32[]', space=smem, size = 0x4, offset = 0x4, fixed_abs, tag = 'smem constant byte address 0x4 - core index']
  #allocation1 [shape = 'u32[144,128]{1,0:T(1,128)}', space=vmem, size = 0x12000, scoped, tag = 'internal scratch']
  #allocation2 [shape = 's32[1]{0}', space=sflag, size = 0x4, scoped, tag = 'scratch operand']
  #allocation3 [shape = 's32[]', space=sflag, size = 0x4, offset = 0, fixed_abs, tag = 'sflag constant byte address 0x0 - dummy sync flag']
  #allocation4 [shape = 'u32[0]{0}', space=smem, size = 0, offset = 0, fixed_abs, tag = 'smem constant byte address 0x0 - null']
  %s0 = inlined_call_operand.hbm [shape: f32[2,8,128], index: 0, kind: input, shape index: {}]
  %s1 = inlined_call_operand.hbm [shape: f32[2,8,128], index: 1, kind: output, shape index: {}]
  %s2 = sld [smem:[#allocation0]]
  $region2: #{tpu_custom_call.1} parent=0
    _
  %s4 = ssub.s32 1, %s2
  %s5 = scalar_select 0, %s4, %s2
  %s7 = sshll.u32 1, 14
  %s8 = sxor.u32 4294967295, %s7
  %s11 = sshll.u32 3, 24
  %s12 = sxor.u32 4294967295, %s11
  %s13 = sand.u32 0, %s12
  %s15 = sor.u32 %s13, 0
  %18 = dma.general %s0, 256, %s1, [#allocation2], [#allocation3], [#allocation4], %s15, 0
  %s19 = smul.u32 2, 8
  %s20 = smul.u32 %s19, 1
  %s21 = sshll.u32 %s20, 4
  %22 = dma.done [#allocation2], %s21
  %23 = vsyncmov [#allocation2]
  %s24 = vpop.sfrf %23
  %p25 = scmp.eq.s32.totalorder %s24, 0
  %p26 = pneg %p25
  %28 = shalt.err (%p26)

</llo_original>
